<compile_context>
chip_gen: v7x
topology: tpu7x:2x2x1
jax: 0.10.0
libtpu: 0.0.40
codegen_flags: <defaults>
</compile_context>

<pallas_src>
import jax
import jax.numpy as jnp
from jax.experimental import pallas as pl
from jax.experimental.pallas import tpu as pltpu


def _round_up(x, m):
    return ((x + m - 1) // m) * m


def _cdiv(a, b):
    return -(-a // b)


def _netd_images_kernel(x_ref, w1_ref, b1_ref, w2_ref, b2_ref, w3_ref, b3_ref,
                        out_ref, h1_ref):
    # x_ref: [tile_n, L]; w1_ref: [L, K]; w2_ref: [K, K]; b1/b2/w3: [1, K];
    # b3_ref: (1, 1) scalar in SMEM.
    x = x_ref[...]
    # layer 1: Linear(L, K) + tanh  (MXU matmul, f32 accumulate; tanh on EUP)
    h1 = jnp.tanh(
        jnp.dot(x, w1_ref[...], preferred_element_type=jnp.float32)
        + b1_ref[...])
    # layer 2: Linear(K, K) + tanh
    h2 = jnp.tanh(
        jnp.dot(h1, w2_ref[...], preferred_element_type=jnp.float32)
        + b2_ref[...])
    # layer 3: Linear(K, 1) as VPU multiply + cross-lane (XLU) reduce, which
    # avoids a 1-column MXU pass.  b3 folded in here from SMEM.
    out = jnp.sum(h2 * w3_ref[...], axis=-1, keepdims=True) + b3_ref[0, 0]

    h1_ref[...] = h1
    out_ref[...] = out


def prepare_params(params):
    """One-time layout prep (transpose / reshape). Cache and reuse across calls
    so the per-step forward never re-lays-out weight-sized constants."""
    K, L = params["w1"].shape
    return {
        "w1t": jnp.asarray(params["w1"], jnp.float32).T,            # [L, K]
        "b1": jnp.asarray(params["b1"], jnp.float32).reshape(1, K),
        "w2t": jnp.asarray(params["w2"], jnp.float32).T,            # [K, K]
        "b2": jnp.asarray(params["b2"], jnp.float32).reshape(1, K),
        "w3r": jnp.asarray(params["w3"], jnp.float32).reshape(1, K),
        "b3": jnp.asarray(params["b3"], jnp.float32).reshape(1, 1),
    }


_VMEM_BUDGET_BYTES = 28 * 1024 * 1024   # tile-selection budget, safe on all gens
_VMEM_LIMIT_BYTES = 48 * 1024 * 1024    # explicit scoped limit, < v7x 64 MiB phys


def _choose_tile_n(N, L, K):
    """Derive the batch tile from the VMEM budget instead of hard-coding it."""
    Lp = _round_up(L, 128)   # VMEM tiles are lane/sublane padded internally
    Kp = _round_up(K, 128)
    # Resident weights (counted double-buffered so the Buffered(1) fallback
    # still fits) + sublane padding of the 1-row operands.
    resident = 2 * 4 * (Lp * Kp + Kp * Kp + 3 * 8 * Kp)
    # Per-batch-row streaming cost: 2x x tile + 2x h1 tile + 2x out tile
    # (lane-padded) + in-kernel f32 temporaries (h1, h2).
    per_row = 4 * (2 * Lp + 2 * Kp + 2 * 128 + 2 * Kp)
    avail = max(_VMEM_BUDGET_BYTES - resident, 8 * per_row)
    tile_n = max(8, (avail // per_row) // 8 * 8)
    # >=512 rows already reaches ~85% of the HBM roofline; cap at 1024 and at
    # ~N/2 (multiple of 8) so moderate batches produce a >=2-step grid and both
    # v7x TensorCores get work.
    tile_n = min(tile_n, 1024, max(8, _round_up(_cdiv(N, 2), 8)))
    return tile_n


def netd_images_forward(x, prep):
    """x: [N, L] float32, prep: output of prepare_params().

    Returns (output [N, 1], h1 [N, K]) matching the PyTorch forward."""
    N, L = x.shape
    K = prep["w1t"].shape[1]
    tile_n = _choose_tile_n(N, L, K)
    grid = (_cdiv(N, tile_n),)

    cost = pl.CostEstimate(
        flops=2 * N * (L * K + K * K + K),
        transcendentals=2 * N * K,
        bytes_accessed=4 * (N * L                         # x read
                            + L * K + K * K + 3 * K + 1   # weights / biases
                            + N * K                       # h1 write
                            + N),                         # out write
    )

    def build_specs(single_buffer_residents):
        resident_kw = (dict(pipeline_mode=pl.Buffered(1))
                       if single_buffer_residents else {})
        in_specs = [
            pl.BlockSpec((tile_n, L), lambda i: (i, 0)),               # x streamed
            pl.BlockSpec((L, K), lambda i: (0, 0), **resident_kw),     # w1^T
            pl.BlockSpec((1, K), lambda i: (0, 0), **resident_kw),     # b1
            pl.BlockSpec((K, K), lambda i: (0, 0), **resident_kw),     # w2^T
            pl.BlockSpec((1, K), lambda i: (0, 0), **resident_kw),     # b2
            pl.BlockSpec((1, K), lambda i: (0, 0), **resident_kw),     # w3 row
            pl.BlockSpec(memory_space=pltpu.MemorySpace.SMEM),         # b3 scalar
        ]
        out_specs = (
            pl.BlockSpec((tile_n, 1), lambda i: (i, 0)),   # output
            pl.BlockSpec((tile_n, K), lambda i: (i, 0)),   # h1 at true K
        )
        return in_specs, out_specs

    def run(single_buffer_residents):
        in_specs, out_specs = build_specs(single_buffer_residents)
        return pl.pallas_call(
            _netd_images_kernel,
            out_shape=(
                jax.ShapeDtypeStruct((N, 1), jnp.float32),
                jax.ShapeDtypeStruct((N, K), jnp.float32),
            ),
            grid=grid,
            in_specs=in_specs,
            out_specs=out_specs,
            compiler_params=pltpu.CompilerParams(
                dimension_semantics=("parallel",),
                vmem_limit_bytes=_VMEM_LIMIT_BYTES,
            ),
            cost_estimate=cost,
        )(x, prep["w1t"], prep["b1"], prep["w2t"], prep["b2"], prep["w3r"],
          prep["b3"])

    try:
        return run(single_buffer_residents=True)
    except Exception:
        # Some jax builds reject pipeline_mode=Buffered(1); default (double)
        # buffering of the small resident operands is still correct.
        return run(single_buffer_residents=False)


def init_params(key, L, K):
    """Deterministic synthetic parameters with PyTorch Linear shapes."""
    ks = jax.random.split(key, 6)
    s1 = 1.0 / jnp.sqrt(L)
    s2 = 1.0 / jnp.sqrt(K)
    return {
        "w1": jax.random.uniform(ks[0], (K, L), jnp.float32, -s1, s1),
        "b1": jax.random.uniform(ks[1], (K,), jnp.float32, -s1, s1),
        "w2": jax.random.uniform(ks[2], (K, K), jnp.float32, -s2, s2),
        "b2": jax.random.uniform(ks[3], (K,), jnp.float32, -s2, s2),
        "w3": jax.random.uniform(ks[4], (1, K), jnp.float32, -s2, s2),
        "b3": jax.random.uniform(ks[5], (1,), jnp.float32, -s2, s2),
    }


def _reference(x, p):
    h1 = jnp.tanh(x @ p["w1"].T + p["b1"])
    h2 = jnp.tanh(h1 @ p["w2"].T + p["b2"])
    out = h2 @ p["w3"].T + p["b3"]
    return out, h1


if __name__ == "__main__":
    key = jax.random.PRNGKey(0)
    k_x, k_p, k_x2 = jax.random.split(key, 3)

    # Small shapes consistent with Linear(L,K) -> Linear(K,K) -> Linear(K,1).
    N, L, K = 8, 32, 32
    x = jax.random.normal(k_x, (N, L), jnp.float32)
    params = init_params(k_p, L, K)
    prep = prepare_params(params)   # one-time layout prep (cacheable)

    out, h1 = netd_images_forward(x, prep)
    jax.block_until_ready((out, h1))

    ref_out, ref_h1 = _reference(x, params)
    assert out.shape == (N, 1) and h1.shape == (N, K)
    assert jnp.allclose(out, ref_out, atol=1e-5, rtol=1e-5)
    assert jnp.allclose(h1, ref_h1, atol=1e-5, rtol=1e-5)

    # Second check: batch not a multiple of the tile nor of 8 -> exercises the
    # ragged last grid block (masked writes) and the resident-weight path.
    N2 = 200
    x2 = jax.random.normal(k_x2, (N2, L), jnp.float32)
    out2, h12 = netd_images_forward(x2, prep)
    jax.block_until_ready((out2, h12))
    ref_out2, ref_h12 = _reference(x2, params)
    assert out2.shape == (N2, 1) and h12.shape == (N2, K)
    assert jnp.allclose(out2, ref_out2, atol=1e-5, rtol=1e-5)
    assert jnp.allclose(h12, ref_h12, atol=1e-5, rtol=1e-5)

    print("KERNEL_OK")
</pallas_src>

<mosaic_0001>
module attributes {stable_mosaic.version = 11 : i64} {
  func.func @_netd_images_kernel(%arg0: i32, %arg1: memref<8x32xf32, #tpu.memory_space<vmem>>, %arg2: memref<32x32xf32, #tpu.memory_space<vmem>>, %arg3: memref<1x32xf32, #tpu.memory_space<vmem>>, %arg4: memref<32x32xf32, #tpu.memory_space<vmem>>, %arg5: memref<1x32xf32, #tpu.memory_space<vmem>>, %arg6: memref<1x32xf32, #tpu.memory_space<vmem>>, %arg7: memref<1x1xf32, #tpu.memory_space<smem>>, %arg8: memref<8x1xf32, #tpu.memory_space<vmem>>, %arg9: memref<8x32xf32, #tpu.memory_space<vmem>>) attributes {dimension_semantics = [#tpu.dimension_semantics<parallel>], iteration_bounds = array<i64: 1>, scalar_prefetch = 0 : i64, scratch_operands = 0 : i64, tpu.core_type = #tpu.core_type<tc>, window_params = [{transform_indices = @transform_0, window_bounds = array<i64: 8, 32>}, {pipeline_mode = #tpu.pipeline_mode<synchronous>, transform_indices = @transform_1, window_bounds = array<i64: 32, 32>}, {pipeline_mode = #tpu.pipeline_mode<synchronous>, transform_indices = @transform_2, window_bounds = array<i64: 1, 32>}, {pipeline_mode = #tpu.pipeline_mode<synchronous>, transform_indices = @transform_3, window_bounds = array<i64: 32, 32>}, {pipeline_mode = #tpu.pipeline_mode<synchronous>, transform_indices = @transform_4, window_bounds = array<i64: 1, 32>}, {pipeline_mode = #tpu.pipeline_mode<synchronous>, transform_indices = @transform_5, window_bounds = array<i64: 1, 32>}, {transform_indices = @transform_6, window_bounds = array<i64: 1, 1>}, {transform_indices = @transform_7, window_bounds = array<i64: 8, 1>}, {transform_indices = @transform_8, window_bounds = array<i64: 8, 32>}]} {
    %c0 = arith.constant 0 : index
    %c0_0 = arith.constant 0 : index
    %0 = vector.load %arg1[%c0, %c0_0] : memref<8x32xf32, #tpu.memory_space<vmem>>, vector<8x32xf32>
    %c0_1 = arith.constant 0 : index
    %c0_2 = arith.constant 0 : index
    %1 = vector.load %arg2[%c0_1, %c0_2] : memref<32x32xf32, #tpu.memory_space<vmem>>, vector<32x32xf32>
    %cst = arith.constant dense<0.000000e+00> : vector<8x32xf32>
    %2 = tpu.matmul %0, %1, %cst {dimension_numbers = #tpu.dot_dimension_numbers<[1], [0], [0], [1], [0, 0, 1, 1], [], []>} : vector<8x32xf32>, vector<32x32xf32>, vector<8x32xf32> -> vector<8x32xf32>
    %c0_3 = arith.constant 0 : index
    %c0_4 = arith.constant 0 : index
    %3 = vector.load %arg3[%c0_3, %c0_4] : memref<1x32xf32, #tpu.memory_space<vmem>>, vector<1x32xf32>
    %4 = vector.broadcast %3 : vector<1x32xf32> to vector<8x32xf32>
    %5 = arith.addf %2, %4 : vector<8x32xf32>
    %6 = math.tanh %5 : vector<8x32xf32>
    %c0_5 = arith.constant 0 : index
    %c0_6 = arith.constant 0 : index
    %7 = vector.load %arg4[%c0_5, %c0_6] : memref<32x32xf32, #tpu.memory_space<vmem>>, vector<32x32xf32>
    %cst_7 = arith.constant dense<0.000000e+00> : vector<8x32xf32>
    %8 = tpu.matmul %6, %7, %cst_7 {dimension_numbers = #tpu.dot_dimension_numbers<[1], [0], [0], [1], [0, 0, 1, 1], [], []>} : vector<8x32xf32>, vector<32x32xf32>, vector<8x32xf32> -> vector<8x32xf32>
    %c0_8 = arith.constant 0 : index
    %c0_9 = arith.constant 0 : index
    %9 = vector.load %arg5[%c0_8, %c0_9] : memref<1x32xf32, #tpu.memory_space<vmem>>, vector<1x32xf32>
    %10 = vector.broadcast %9 : vector<1x32xf32> to vector<8x32xf32>
    %11 = arith.addf %8, %10 : vector<8x32xf32>
    %12 = math.tanh %11 : vector<8x32xf32>
    %c0_10 = arith.constant 0 : index
    %c0_11 = arith.constant 0 : index
    %13 = vector.load %arg6[%c0_10, %c0_11] : memref<1x32xf32, #tpu.memory_space<vmem>>, vector<1x32xf32>
    %14 = vector.broadcast %13 : vector<1x32xf32> to vector<8x32xf32>
    %15 = arith.mulf %12, %14 : vector<8x32xf32>
    %cst_12 = arith.constant dense<0.000000e+00> : vector<8xf32>
    %16 = vector.multi_reduction <add>, %15, %cst_12 [1] : vector<8x32xf32> to vector<8xf32>
    %17 = vector.shape_cast %16 : vector<8xf32> to vector<8x1xf32>
    %c0_13 = arith.constant 0 : index
    %c0_14 = arith.constant 0 : index
    %18 = memref.load %arg7[%c0_13, %c0_14] : memref<1x1xf32, #tpu.memory_space<smem>>
    %19 = vector.broadcast %18 : f32 to vector<8x1xf32>
    %20 = arith.addf %17, %19 : vector<8x1xf32>
    %c0_15 = arith.constant 0 : index
    %c0_16 = arith.constant 0 : index
    %21 = vector.load %arg9[%c0_15, %c0_16] : memref<8x32xf32, #tpu.memory_space<vmem>>, vector<8x32xf32>
    tpu.vector_store %arg9[%c0_15, %c0_16], %6 {strides = array<i32>} : memref<8x32xf32, #tpu.memory_space<vmem>>, vector<8x32xf32>,
    %c0_17 = arith.constant 0 : index
    %c0_18 = arith.constant 0 : index
    %22 = vector.load %arg8[%c0_17, %c0_18] : memref<8x1xf32, #tpu.memory_space<vmem>>, vector<8x1xf32>
    tpu.vector_store %arg8[%c0_17, %c0_18], %20 {strides = array<i32>} : memref<8x1xf32, #tpu.memory_space<vmem>>, vector<8x1xf32>,
    return
  }
  func.func @transform_0(%arg0: i32) -> (i32, i32) {
    %c0_i32 = arith.constant 0 : i32
    %c0_i32_0 = arith.constant 0 : i32
    return %arg0, %c0_i32 : i32, i32
  }
  func.func @transform_1(%arg0: i32) -> (i32, i32) {
    %c0_i32 = arith.constant 0 : i32
    %c0_i32_0 = arith.constant 0 : i32
    %c0_i32_1 = arith.constant 0 : i32
    return %c0_i32, %c0_i32_0 : i32, i32
  }
  func.func @transform_2(%arg0: i32) -> (i32, i32) {
    %c0_i32 = arith.constant 0 : i32
    %c0_i32_0 = arith.constant 0 : i32
    %c0_i32_1 = arith.constant 0 : i32
    return %c0_i32, %c0_i32_0 : i32, i32
  }
  func.func @transform_3(%arg0: i32) -> (i32, i32) {
    %c0_i32 = arith.constant 0 : i32
    %c0_i32_0 = arith.constant 0 : i32
    %c0_i32_1 = arith.constant 0 : i32
    return %c0_i32, %c0_i32_0 : i32, i32
  }
  func.func @transform_4(%arg0: i32) -> (i32, i32) {
    %c0_i32 = arith.constant 0 : i32
    %c0_i32_0 = arith.constant 0 : i32
    %c0_i32_1 = arith.constant 0 : i32
    return %c0_i32, %c0_i32_0 : i32, i32
  }
  func.func @transform_5(%arg0: i32) -> (i32, i32) {
    %c0_i32 = arith.constant 0 : i32
    %c0_i32_0 = arith.constant 0 : i32
    %c0_i32_1 = arith.constant 0 : i32
    return %c0_i32, %c0_i32_0 : i32, i32
  }
  func.func @transform_6(%arg0: i32) -> (i32, i32) {
    %c0_i32 = arith.constant 0 : i32
    %c0_i32_0 = arith.constant 0 : i32
    %c0_i32_1 = arith.constant 0 : i32
    return %c0_i32, %c0_i32_0 : i32, i32
  }
  func.func @transform_7(%arg0: i32) -> (i32, i32) {
    %c0_i32 = arith.constant 0 : i32
    %c0_i32_0 = arith.constant 0 : i32
    return %arg0, %c0_i32 : i32, i32
  }
  func.func @transform_8(%arg0: i32) -> (i32, i32) {
    %c0_i32 = arith.constant 0 : i32
    %c0_i32_0 = arith.constant 0 : i32
    return %arg0, %c0_i32 : i32, i32
  }
}

module attributes {stable_mosaic.version = 11 : i64} {
  func.func @_netd_images_kernel(%arg0: i32, %arg1: memref<8x32xf32, #tpu.memory_space<vmem>>, %arg2: memref<32x32xf32, #tpu.memory_space<vmem>>, %arg3: memref<1x32xf32, #tpu.memory_space<vmem>>, %arg4: memref<32x32xf32, #tpu.memory_space<vmem>>, %arg5: memref<1x32xf32, #tpu.memory_space<vmem>>, %arg6: memref<1x32xf32, #tpu.memory_space<vmem>>, %arg7: memref<1x1xf32, #tpu.memory_space<smem>>, %arg8: memref<8x1xf32, #tpu.memory_space<vmem>>, %arg9: memref<8x32xf32, #tpu.memory_space<vmem>>) attributes {dimension_semantics = [#tpu.dimension_semantics<parallel>], iteration_bounds = array<i64: 1>, scalar_prefetch = 0 : i64, scratch_operands = 0 : i64, tpu.core_type = #tpu.core_type<tc>, window_params = [{transform_indices = @transform_0, window_bounds = array<i64: 8, 32>}, {pipeline_mode = #tpu.pipeline_mode<synchronous>, transform_indices = @transform_1, window_bounds = array<i64: 32, 32>}, {pipeline_mode = #tpu.pipeline_mode<synchronous>, transform_indices = @transform_2, window_bounds = array<i64: 1, 32>}, {pipeline_mode = #tpu.pipeline_mode<synchronous>, transform_indices = @transform_3, window_bounds = array<i64: 32, 32>}, {pipeline_mode = #tpu.pipeline_mode<synchronous>, transform_indices = @transform_4, window_bounds = array<i64: 1, 32>}, {pipeline_mode = #tpu.pipeline_mode<synchronous>, transform_indices = @transform_5, window_bounds = array<i64: 1, 32>}, {transform_indices = @transform_6, window_bounds = array<i64: 1, 1>}, {transform_indices = @transform_7, window_bounds = array<i64: 8, 1>}, {transform_indices = @transform_8, window_bounds = array<i64: 8, 32>}]} {
    %c0 = arith.constant 0 : index
    %c0_0 = arith.constant 0 : index
    %0 = vector.load %arg1[%c0, %c0_0] : memref<8x32xf32, #tpu.memory_space<vmem>>, vector<8x32xf32>
    %c0_1 = arith.constant 0 : index
    %c0_2 = arith.constant 0 : index
    %1 = vector.load %arg2[%c0_1, %c0_2] : memref<32x32xf32, #tpu.memory_space<vmem>>, vector<32x32xf32>
    %cst = arith.constant dense<0.000000e+00> : vector<8x32xf32>
    %2 = tpu.matmul %0, %1, %cst {dimension_numbers = #tpu.dot_dimension_numbers<[1], [0], [0], [1], [0, 0, 1, 1], [], []>} : vector<8x32xf32>, vector<32x32xf32>, vector<8x32xf32> -> vector<8x32xf32>
    %c0_3 = arith.constant 0 : index
    %c0_4 = arith.constant 0 : index
    %3 = vector.load %arg3[%c0_3, %c0_4] : memref<1x32xf32, #tpu.memory_space<vmem>>, vector<1x32xf32>
    %4 = vector.broadcast %3 : vector<1x32xf32> to vector<8x32xf32>
    %5 = arith.addf %2, %4 : vector<8x32xf32>
    %6 = math.tanh %5 : vector<8x32xf32>
    %c0_5 = arith.constant 0 : index
    %c0_6 = arith.constant 0 : index
    %7 = vector.load %arg4[%c0_5, %c0_6] : memref<32x32xf32, #tpu.memory_space<vmem>>, vector<32x32xf32>
    %cst_7 = arith.constant dense<0.000000e+00> : vector<8x32xf32>
    %8 = tpu.matmul %6, %7, %cst_7 {dimension_numbers = #tpu.dot_dimension_numbers<[1], [0], [0], [1], [0, 0, 1, 1], [], []>} : vector<8x32xf32>, vector<32x32xf32>, vector<8x32xf32> -> vector<8x32xf32>
    %c0_8 = arith.constant 0 : index
    %c0_9 = arith.constant 0 : index
    %9 = vector.load %arg5[%c0_8, %c0_9] : memref<1x32xf32, #tpu.memory_space<vmem>>, vector<1x32xf32>
    %10 = vector.broadcast %9 : vector<1x32xf32> to vector<8x32xf32>
    %11 = arith.addf %8, %10 : vector<8x32xf32>
    %12 = math.tanh %11 : vector<8x32xf32>
    %c0_10 = arith.constant 0 : index
    %c0_11 = arith.constant 0 : index
    %13 = vector.load %arg6[%c0_10, %c0_11] : memref<1x32xf32, #tpu.memory_space<vmem>>, vector<1x32xf32>
    %14 = vector.broadcast %13 : vector<1x32xf32> to vector<8x32xf32>
    %15 = arith.mulf %12, %14 : vector<8x32xf32>
    %cst_12 = arith.constant dense<0.000000e+00> : vector<8xf32>
    %16 = vector.multi_reduction <add>, %15, %cst_12 [1] : vector<8x32xf32> to vector<8xf32>
    %17 = vector.shape_cast %16 : vector<8xf32> to vector<8x1xf32>
    %c0_13 = arith.constant 0 : index
    %c0_14 = arith.constant 0 : index
    %18 = memref.load %arg7[%c0_13, %c0_14] : memref<1x1xf32, #tpu.memory_space<smem>>
    %19 = vector.broadcast %18 : f32 to vector<8x1xf32>
    %20 = arith.addf %17, %19 : vector<8x1xf32>
    %c0_15 = arith.constant 0 : index
    %c0_16 = arith.constant 0 : index
    %21 = vector.load %arg9[%c0_15, %c0_16] : memref<8x32xf32, #tpu.memory_space<vmem>>, vector<8x32xf32>
    tpu.vector_store %arg9[%c0_15, %c0_16], %6 {strides = array<i32>} : memref<8x32xf32, #tpu.memory_space<vmem>>, vector<8x32xf32>,
    %c0_17 = arith.constant 0 : index
    %c0_18 = arith.constant 0 : index
    %22 = vector.load %arg8[%c0_17, %c0_18] : memref<8x1xf32, #tpu.memory_space<vmem>>, vector<8x1xf32>
    tpu.vector_store %arg8[%c0_17, %c0_18], %20 {strides = array<i32>} : memref<8x1xf32, #tpu.memory_space<vmem>>, vector<8x1xf32>,
    return
  }
  func.func @transform_0(%arg0: i32) -> (i32, i32) {
    %c0_i32 = arith.constant 0 : i32
    %c0_i32_0 = arith.constant 0 : i32
    return %arg0, %c0_i32 : i32, i32
  }
  func.func @transform_1(%arg0: i32) -> (i32, i32) {
    %c0_i32 = arith.constant 0 : i32
    %c0_i32_0 = arith.constant 0 : i32
    %c0_i32_1 = arith.constant 0 : i32
    return %c0_i32, %c0_i32_0 : i32, i32
  }
  func.func @transform_2(%arg0: i32) -> (i32, i32) {
    %c0_i32 = arith.constant 0 : i32
    %c0_i32_0 = arith.constant 0 : i32
    %c0_i32_1 = arith.constant 0 : i32
    return %c0_i32, %c0_i32_0 : i32, i32
  }
  func.func @transform_3(%arg0: i32) -> (i32, i32) {
    %c0_i32 = arith.constant 0 : i32
    %c0_i32_0 = arith.constant 0 : i32
    %c0_i32_1 = arith.constant 0 : i32
    return %c0_i32, %c0_i32_0 : i32, i32
  }
  func.func @transform_4(%arg0: i32) -> (i32, i32) {
    %c0_i32 = arith.constant 0 : i32
    %c0_i32_0 = arith.constant 0 : i32
    %c0_i32_1 = arith.constant 0 : i32
    return %c0_i32, %c0_i32_0 : i32, i32
  }
  func.func @transform_5(%arg0: i32) -> (i32, i32) {
    %c0_i32 = arith.constant 0 : i32
    %c0_i32_0 = arith.constant 0 : i32
    %c0_i32_1 = arith.constant 0 : i32
    return %c0_i32, %c0_i32_0 : i32, i32
  }
  func.func @transform_6(%arg0: i32) -> (i32, i32) {
    %c0_i32 = arith.constant 0 : i32
    %c0_i32_0 = arith.constant 0 : i32
    %c0_i32_1 = arith.constant 0 : i32
    return %c0_i32, %c0_i32_0 : i32, i32
  }
  func.func @transform_7(%arg0: i32) -> (i32, i32) {
    %c0_i32 = arith.constant 0 : i32
    %c0_i32_0 = arith.constant 0 : i32
    return %arg0, %c0_i32 : i32, i32
  }
  func.func @transform_8(%arg0: i32) -> (i32, i32) {
    %c0_i32 = arith.constant 0 : i32
    %c0_i32_0 = arith.constant 0 : i32
    return %arg0, %c0_i32 : i32, i32
  }
}

</mosaic_0001>

<llo_original>
// kernel: tpu_custom_call.1
$region0: #{tpu_custom_call.1}
  #allocation0 [shape = 'u32[]', space=smem, size = 0x4, offset = 0x4, fixed_abs, tag = 'smem constant byte address 0x4 - core index']
  #allocation1 [shape = 'u32[144,128]{1,0:T(1,128)}', space=vmem, size = 0x12000, scoped, tag = 'internal scratch']
  #allocation2 [shape = 'f32[1,1]{1,0:T(1,128)S(6)}', space=smem, size = 0x200, scoped, tag = 'scoped memory for tpu_custom_call.1']
  %s0 = inlined_call_operand.hbm [shape: f32[8,32], index: 0, kind: input, shape index: {}]
  %s1 = inlined_call_operand.hbm [shape: f32[32,32], index: 1, kind: input, shape index: {}]
  %s2 = inlined_call_operand.vmem [shape: f32[1,32], index: 2, kind: input, shape index: {}]
  %s3 = inlined_call_operand.hbm [shape: f32[32,32], index: 3, kind: input, shape index: {}]
  %s4 = inlined_call_operand.vmem [shape: f32[1,32], index: 4, kind: input, shape index: {}]
  %s5 = inlined_call_operand.vmem [shape: f32[1,32], index: 5, kind: input, shape index: {}]
  %s6 = inlined_call_operand.<no memory space> [shape: f32[1,1], index: 6, kind: input, shape index: {}]
  %s7 = inlined_call_operand.vmem [shape: f32[8,1], index: 7, kind: output, shape index: {0}]
  %s8 = inlined_call_operand.hbm [shape: f32[8,32], index: 8, kind: output, shape index: {1}]
  %9 = xla_tuple %s7, %s8
  %s10 = sld [smem:[#allocation0]]
  $region58: #{tpu_custom_call.1} parent=0
    _
  %s12 = ssub.s32 1, %s10
  %s13 = scalar_select 0, %s12, %s10
  %14 = sst [smem:[#allocation2]] %s6
  $region1: #{tpu_custom_call.1} parent=0
    #allocation3 [shape = 'u8[4096]{0}', space=vmem, size = 0x1000, scoped, tag = 'input window, operand 0, single buffered']
    #allocation4 [shape = 's32[1]{0}', space=sflag, size = 0x4, scoped, tag = 'scoped memory for tpu_custom_call.1']
    #allocation5 [shape = 's32[1]{0}', space=sflag, size = 0x4, scoped, tag = 'scoped memory for tpu_custom_call.1']
    #allocation6 [shape = 'u8[16384]{0}', space=vmem, size = 0x4000, scoped, tag = 'input window, operand 1, single buffered']
    #allocation7 [shape = 's32[1]{0}', space=sflag, size = 0x4, scoped, tag = 'scoped memory for tpu_custom_call.1']
    #allocation8 [shape = 'u8[16384]{0}', space=vmem, size = 0x4000, scoped, tag = 'input window, operand 3, single buffered']
    #allocation9 [shape = 'u8[4096]{0}', space=vmem, size = 0x1000, scoped, tag = 'output window, operand 1, single buffered']
    %15 = vsyncpa [#allocation4], 0
    %16 = vsyncpa [#allocation7], 0
    %17 = vsyncpa [#allocation5], 0
    // Predicated region
    $region2: #{tpu_custom_call.1} parent=1 // pred_check
      _
    $region3: #{tpu_custom_call.1} parent=1 // pred_check_branch
      %19 = sbr.rel (0) target = $region5
    $region4: #{tpu_custom_call.1} parent=1 // pred_region
      %s21 = ssub.s32 128, 128
      %22 = vsyncadd [#allocation4], %s21
      %s24 = sshll.u32 [#allocation3], 4
      %s25 = int_to_ptr.vmem [resolvable:$true] %s24
      %27 = dma.hbm_to_vmem [thread:$0]  %s0, 128, %s25, [#allocation4]
    $region5: #{tpu_custom_call.1} parent=1 // pred_fallthru
      _
    // Predicated region
    $region6: #{tpu_custom_call.1} parent=1 // pred_check
      _
    $region7: #{tpu_custom_call.1} parent=1 // pred_check_branch
      %29 = sbr.rel (0) target = $region9
    $region8: #{tpu_custom_call.1} parent=1 // pred_region
      %s31 = ssub.s32 512, 512
      %32 = vsyncadd [#allocation7], %s31
      %s33 = sshll.u32 [#allocation6], 4
      %s34 = int_to_ptr.vmem [resolvable:$true] %s33
      %39 = dma.hbm_to_vmem [thread:$0]  %s1, 512, %s34, [#allocation7], 128, 128, 8
    $region9: #{tpu_custom_call.1} parent=1 // pred_fallthru
      _
    // Predicated region
    $region10: #{tpu_custom_call.1} parent=1 // pred_check
      _
    $region11: #{tpu_custom_call.1} parent=1 // pred_check_branch
      %41 = sbr.rel (0) target = $region13
    $region12: #{tpu_custom_call.1} parent=1 // pred_region
      _
    $region13: #{tpu_custom_call.1} parent=1 // pred_fallthru
      _
    // Predicated region
    $region14: #{tpu_custom_call.1} parent=1 // pred_check
      _
    $region15: #{tpu_custom_call.1} parent=1 // pred_check_branch
      %43 = sbr.rel (0) target = $region17
    $region16: #{tpu_custom_call.1} parent=1 // pred_region
      %s45 = ssub.s32 512, 512
      %46 = vsyncadd [#allocation7], %s45
      %s47 = sshll.u32 [#allocation8], 4
      %s48 = int_to_ptr.vmem [resolvable:$true] %s47
      %53 = dma.hbm_to_vmem [thread:$0]  %s3, 512, %s48, [#allocation7], 128, 128, 8
    $region17: #{tpu_custom_call.1} parent=1 // pred_fallthru
      _
    // Predicated region
    $region18: #{tpu_custom_call.1} parent=1 // pred_check
      _
    $region19: #{tpu_custom_call.1} parent=1 // pred_check_branch
      %55 = sbr.rel (0) target = $region21
    $region20: #{tpu_custom_call.1} parent=1 // pred_region
      _
    $region21: #{tpu_custom_call.1} parent=1 // pred_fallthru
      _
    // Predicated region
    $region22: #{tpu_custom_call.1} parent=1 // pred_check
      _
    $region23: #{tpu_custom_call.1} parent=1 // pred_check_branch
      %57 = sbr.rel (0) target = $region25
    $region24: #{tpu_custom_call.1} parent=1 // pred_region
      _
    $region25: #{tpu_custom_call.1} parent=1 // pred_fallthru
      _
    // Predicated region
    $region26: #{tpu_custom_call.1} parent=1 // pred_check
      _
    $region27: #{tpu_custom_call.1} parent=1 // pred_check_branch
      %59 = sbr.rel (0) target = $region29
    $region28: #{tpu_custom_call.1} parent=1 // pred_region
      _
    $region29: #{tpu_custom_call.1} parent=1 // pred_fallthru
      _
    // Predicated region
    $region30: #{tpu_custom_call.1} parent=1 // pred_check
      _
    $region31: #{tpu_custom_call.1} parent=1 // pred_check_branch
      %61 = sbr.rel (0) target = $region33
    $region32: #{tpu_custom_call.1} parent=1 // pred_region
      %62 = dma.done [#allocation4], 128
    $region33: #{tpu_custom_call.1} parent=1 // pred_fallthru
      _
    // Predicated region
    $region34: #{tpu_custom_call.1} parent=1 // pred_check
      _
    $region35: #{tpu_custom_call.1} parent=1 // pred_check_branch
      %64 = sbr.rel (0) target = $region37
    $region36: #{tpu_custom_call.1} parent=1 // pred_region
      %65 = dma.done [#allocation7], 512
    $region37: #{tpu_custom_call.1} parent=1 // pred_fallthru
      _
    // Predicated region
    $region38: #{tpu_custom_call.1} parent=1 // pred_check
      _
    $region39: #{tpu_custom_call.1} parent=1 // pred_check_branch
      %67 = sbr.rel (0) target = $region41
    $region40: #{tpu_custom_call.1} parent=1 // pred_region
      %68 = dma.done [#allocation7], 512
    $region41: #{tpu_custom_call.1} parent=1 // pred_fallthru
      _
    %v69 = vld [vmem:[#allocation3] sm:$0xff]
    %v70 = vld [vmem:[#allocation6] sm:$0xff]
    %v71 = vld [vmem:[#allocation6 + $0x8] sm:$0xff]
    %v72 = vld [vmem:[#allocation6 + $0x10] sm:$0xff]
    %v73 = vld [vmem:[#allocation6 + $0x18] sm:$0xff]
    %v74 = vld [vmem:[%s2] sm:$0x1]
    %v76 = vlaneseq
    %v77 = vshrl.u32 %v76, 7
    %v78 = vsub.s32 0, %v77
    %v79 = vrot.slane %v74, %v78
    %vm81 = vcmask 261120
    %v83 = vsel %vm81, %v69, 0
    %85 = vmatprep.subr.mxu0 0.0
    %86 = vmatpush1.msra.mxu0 %v70
    %87 = vmatprep.subr.mxu0 0.0
    %88 = vmatpush1.msra.mxu0 %v71
    %89 = vmatprep.subr.mxu0 0.0
    %90 = vmatpush1.msra.mxu0 %v72
    %91 = vmatprep.subr.mxu0 0.0
    %92 = vmatpush1.msra.mxu0 %v73
    %93 = vmatprep.subr.mxu0 0.0
    %94 = vmatpush1.msra.mxu0 0.0
    %95 = vmatprep.subr.mxu0 0.0
    %96 = vmatpush1.msra.mxu0 0.0
    %97 = vmatprep.subr.mxu0 0.0
    %98 = vmatpush1.msra.mxu0 0.0
    %99 = vmatprep.subr.mxu0 0.0
    %100 = vmatpush1.msra.mxu0 0.0
    %101 = vmatprep.subr.mxu0 0.0
    %102 = vmatpush1.msra.mxu0 0.0
    %103 = vmatprep.subr.mxu0 0.0
    %104 = vmatpush1.msra.mxu0 0.0
    %105 = vmatprep.subr.mxu0 0.0
    %106 = vmatpush1.msra.mxu0 0.0
    %107 = vmatprep.subr.mxu0 0.0
    %108 = vmatpush1.msra.mxu0 0.0
    %109 = vmatprep.subr.mxu0 0.0
    %110 = vmatpush1.msra.mxu0 0.0
    %111 = vmatprep.subr.mxu0 0.0
    %112 = vmatpush1.msra.mxu0 0.0
    %113 = vmatprep.subr.mxu0 0.0
    %114 = vmatpush1.msra.mxu0 0.0
    %115 = vmatprep.subr.mxu0 0.0
    %116 = vmatpush1.msra.mxu0 0.0
    %117 = vmatprep.subr.mxu0 0.0
    %118 = vmatpush1.msra.mxu0 0.0
    %119 = vmatprep.subr.mxu0 0.0
    %120 = vmatpush1.msra.mxu0 0.0
    %121 = vmatprep.subr.mxu0 0.0
    %122 = vmatpush1.msra.mxu0 0.0
    %123 = vmatprep.subr.mxu0 0.0
    %124 = vmatpush1.msra.mxu0 0.0
    %125 = vmatprep.subr.mxu0 0.0
    %126 = vmatpush1.msra.mxu0 0.0
    %127 = vmatprep.subr.mxu0 0.0
    %128 = vmatpush1.msra.mxu0 0.0
    %129 = vmatprep.subr.mxu0 0.0
    %130 = vmatpush1.msra.mxu0 0.0
    %131 = vmatprep.subr.mxu0 0.0
    %132 = vmatpush1.msra.mxu0 0.0
    %133 = vmatprep.subr.mxu0 0.0
    %134 = vmatpush1.msra.mxu0 0.0
    %135 = vmatprep.subr.mxu0 0.0
    %136 = vmatpush1.msra.mxu0 0.0
    %137 = vmatprep.subr.mxu0 0.0
    %138 = vmatpush1.msra.mxu0 0.0
    %139 = vmatprep.subr.mxu0 0.0
    %140 = vmatpush1.msra.mxu0 0.0
    %141 = vmatprep.subr.mxu0 0.0
    %142 = vmatpush1.msra.mxu0 0.0
    %143 = vmatprep.subr.mxu0 0.0
    %144 = vmatpush1.msra.mxu0 0.0
    %145 = vmatprep.subr.mxu0 0.0
    %146 = vmatpush1.msra.mxu0 0.0
    %147 = vmatprep.subr.mxu0 0.0
    %148 = vmatpush1.msra.mxu0 0.0
    %149 = vmatprep.mubr.f32.mxu0 0.0
    %150 = vmatmul.mubr.f32.gmra.mrb[0].mxu0 %v83
    %v151 = vpop.f32.mrb[0].mxu0
    %v152 = vadd.f32 %v79, %v151
    %v153 = vpop.f32.mrb[0].mxu0
    %154 = vdwg.mxu0
    %v155 = vtanh.pop %v152
    %v156 = vld [vmem:[#allocation8] sm:$0xff]
    %v157 = vld [vmem:[#allocation8 + $0x8] sm:$0xff]
    %v158 = vld [vmem:[#allocation8 + $0x10] sm:$0xff]
    %v159 = vld [vmem:[#allocation8 + $0x18] sm:$0xff]
    %v160 = vld [vmem:[%s4] sm:$0x1]
    %v162 = vlaneseq
    %v163 = vshrl.u32 %v162, 7
    %v164 = vsub.s32 0, %v163
    %v165 = vrot.slane %v160, %v164
    %v168 = vsel %vm81, %v155, 0
    %170 = vmatprep.subr.mxu0 0.0
    %171 = vmatpush1.msra.mxu0 %v156
    %172 = vmatprep.subr.mxu0 0.0
    %173 = vmatpush1.msra.mxu0 %v157
    %174 = vmatprep.subr.mxu0 0.0
    %175 = vmatpush1.msra.mxu0 %v158
    %176 = vmatprep.subr.mxu0 0.0
    %177 = vmatpush1.msra.mxu0 %v159
    %178 = vmatprep.subr.mxu0 0.0
    %179 = vmatpush1.msra.mxu0 0.0
    %180 = vmatprep.subr.mxu0 0.0
    %181 = vmatpush1.msra.mxu0 0.0
    %182 = vmatprep.subr.mxu0 0.0
    %183 = vmatpush1.msra.mxu0 0.0
    %184 = vmatprep.subr.mxu0 0.0
    %185 = vmatpush1.msra.mxu0 0.0
    %186 = vmatprep.subr.mxu0 0.0
    %187 = vmatpush1.msra.mxu0 0.0
    %188 = vmatprep.subr.mxu0 0.0
    %189 = vmatpush1.msra.mxu0 0.0
    %190 = vmatprep.subr.mxu0 0.0
    %191 = vmatpush1.msra.mxu0 0.0
    %192 = vmatprep.subr.mxu0 0.0
    %193 = vmatpush1.msra.mxu0 0.0
    %194 = vmatprep.subr.mxu0 0.0
    %195 = vmatpush1.msra.mxu0 0.0
    %196 = vmatprep.subr.mxu0 0.0
    %197 = vmatpush1.msra.mxu0 0.0
    %198 = vmatprep.subr.mxu0 0.0
    %199 = vmatpush1.msra.mxu0 0.0
    %200 = vmatprep.subr.mxu0 0.0
    %201 = vmatpush1.msra.mxu0 0.0
    %202 = vmatprep.subr.mxu0 0.0
    %203 = vmatpush1.msra.mxu0 0.0
    %204 = vmatprep.subr.mxu0 0.0
    %205 = vmatpush1.msra.mxu0 0.0
    %206 = vmatprep.subr.mxu0 0.0
    %207 = vmatpush1.msra.mxu0 0.0
    %208 = vmatprep.subr.mxu0 0.0
    %209 = vmatpush1.msra.mxu0 0.0
    %210 = vmatprep.subr.mxu0 0.0
    %211 = vmatpush1.msra.mxu0 0.0
    %212 = vmatprep.subr.mxu0 0.0
    %213 = vmatpush1.msra.mxu0 0.0
    %214 = vmatprep.subr.mxu0 0.0
    %215 = vmatpush1.msra.mxu0 0.0
    %216 = vmatprep.subr.mxu0 0.0
    %217 = vmatpush1.msra.mxu0 0.0
    %218 = vmatprep.subr.mxu0 0.0
    %219 = vmatpush1.msra.mxu0 0.0
    %220 = vmatprep.subr.mxu0 0.0
    %221 = vmatpush1.msra.mxu0 0.0
    %222 = vmatprep.subr.mxu0 0.0
    %223 = vmatpush1.msra.mxu0 0.0
    %224 = vmatprep.subr.mxu0 0.0
    %225 = vmatpush1.msra.mxu0 0.0
    %226 = vmatprep.subr.mxu0 0.0
    %227 = vmatpush1.msra.mxu0 0.0
    %228 = vmatprep.subr.mxu0 0.0
    %229 = vmatpush1.msra.mxu0 0.0
    %230 = vmatprep.subr.mxu0 0.0
    %231 = vmatpush1.msra.mxu0 0.0
    %232 = vmatprep.subr.mxu0 0.0
    %233 = vmatpush1.msra.mxu0 0.0
    %234 = vmatprep.mubr.f32.mxu0 0.0
    %235 = vmatmul.mubr.f32.gmra.mrb[0].mxu0 %v168
    %v236 = vpop.f32.mrb[0].mxu0
    %v237 = vadd.f32 %v165, %v236
    %v238 = vpop.f32.mrb[0].mxu0
    %239 = vdwg.mxu0
    %v240 = vtanh.pop %v237
    %v241 = vld [vmem:[%s5] sm:$0x1]
    %v243 = vlaneseq
    %v244 = vshrl.u32 %v243, 7
    %v245 = vsub.s32 0, %v244
    %v246 = vrot.slane %v241, %v245
    %v248 = vmul.f32 %v240, %v246
    %v249 = vsel %vm81, %v248, 0.0
    %250 = vadd.xlane.f32.xlu0 %v249
    %v251 = vpop.xlane.xlu0 %250
    %s252 = sld [smem:[#allocation2]]
    %v253 = vstv %s252
    %v254 = vadd.f32 %v251, %v253
    %255 = vst.msk [vmem:[#allocation9] sm:$0xff] %vm81, %v155
    %vm256 = vcmask 7168
    %257 = vst.msk [vmem:[%s7] sm:$0xff] %vm256, %v254
    // Predicated region
    $region42: #{tpu_custom_call.1} parent=1 // pred_check
      _
    $region43: #{tpu_custom_call.1} parent=1 // pred_check_branch
      %259 = sbr.rel (0) target = $region45
    $region44: #{tpu_custom_call.1} parent=1 // pred_region
      _
    $region45: #{tpu_custom_call.1} parent=1 // pred_fallthru
      _
    // Predicated region
    $region46: #{tpu_custom_call.1} parent=1 // pred_check
      _
    $region47: #{tpu_custom_call.1} parent=1 // pred_check_branch
      %261 = sbr.rel (0) target = $region49
    $region48: #{tpu_custom_call.1} parent=1 // pred_region
      %s263 = ssub.s32 128, 128
      %264 = vsyncadd [#allocation5], %s263
      %s266 = sshll.u32 [#allocation9], 4
      %s267 = int_to_ptr.vmem [resolvable:$true] %s266
      %269 = dma.vmem_to_hbm [thread:$0]  %s267, 128, %s8, [#allocation5]
    $region49: #{tpu_custom_call.1} parent=1 // pred_fallthru
      _
    // Predicated region
    $region50: #{tpu_custom_call.1} parent=1 // pred_check
      _
    $region51: #{tpu_custom_call.1} parent=1 // pred_check_branch
      %271 = sbr.rel (0) target = $region53
    $region52: #{tpu_custom_call.1} parent=1 // pred_region
      _
    $region53: #{tpu_custom_call.1} parent=1 // pred_fallthru
      _
    // Predicated region
    $region54: #{tpu_custom_call.1} parent=1 // pred_check
      _
    $region55: #{tpu_custom_call.1} parent=1 // pred_check_branch
      %273 = sbr.rel (0) target = $region57
    $region56: #{tpu_custom_call.1} parent=1 // pred_region
      %274 = dma.done [#allocation5], 128
    $region57: #{tpu_custom_call.1} parent=1 // pred_fallthru
      _
    %275 = vsyncpa [#allocation4], 1
    %276 = vsyncpa [#allocation7], 1
    %277 = vsyncpa [#allocation5], 1

// kernel: tpu_custom_call.1
$region0: #{tpu_custom_call.1}
  #allocation0 [shape = 'u32[]', space=smem, size = 0x4, offset = 0x4, fixed_abs, tag = 'smem constant byte address 0x4 - core index']
  #allocation1 [shape = 'u32[144,128]{1,0:T(1,128)}', space=vmem, size = 0x12000, scoped, tag = 'internal scratch']
  #allocation2 [shape = 'f32[1,1]{1,0:T(1,128)S(6)}', space=smem, size = 0x200, scoped, tag = 'scoped memory for tpu_custom_call.1']
  %s0 = inlined_call_operand.hbm [shape: f32[8,32], index: 0, kind: input, shape index: {}]
  %s1 = inlined_call_operand.hbm [shape: f32[32,32], index: 1, kind: input, shape index: {}]
  %s2 = inlined_call_operand.vmem [shape: f32[1,32], index: 2, kind: input, shape index: {}]
  %s3 = inlined_call_operand.hbm [shape: f32[32,32], index: 3, kind: input, shape index: {}]
  %s4 = inlined_call_operand.vmem [shape: f32[1,32], index: 4, kind: input, shape index: {}]
  %s5 = inlined_call_operand.vmem [shape: f32[1,32], index: 5, kind: input, shape index: {}]
  %s6 = inlined_call_operand.<no memory space> [shape: f32[1,1], index: 6, kind: input, shape index: {}]
  %s7 = inlined_call_operand.vmem [shape: f32[8,1], index: 7, kind: output, shape index: {0}]
  %s8 = inlined_call_operand.hbm [shape: f32[8,32], index: 8, kind: output, shape index: {1}]
  %9 = xla_tuple %s7, %s8
  %s10 = sld [smem:[#allocation0]]
  $region58: #{tpu_custom_call.1} parent=0
    _
  %s12 = ssub.s32 1, %s10
  %s13 = scalar_select 0, %s12, %s10
  %14 = sst [smem:[#allocation2]] %s6
  $region1: #{tpu_custom_call.1} parent=0
    #allocation3 [shape = 'u8[4096]{0}', space=vmem, size = 0x1000, scoped, tag = 'input window, operand 0, single buffered']
    #allocation4 [shape = 's32[1]{0}', space=sflag, size = 0x4, scoped, tag = 'scoped memory for tpu_custom_call.1']
    #allocation5 [shape = 's32[1]{0}', space=sflag, size = 0x4, scoped, tag = 'scoped memory for tpu_custom_call.1']
    #allocation6 [shape = 'u8[16384]{0}', space=vmem, size = 0x4000, scoped, tag = 'input window, operand 1, single buffered']
    #allocation7 [shape = 's32[1]{0}', space=sflag, size = 0x4, scoped, tag = 'scoped memory for tpu_custom_call.1']
    #allocation8 [shape = 'u8[16384]{0}', space=vmem, size = 0x4000, scoped, tag = 'input window, operand 3, single buffered']
    #allocation9 [shape = 'u8[4096]{0}', space=vmem, size = 0x1000, scoped, tag = 'output window, operand 1, single buffered']
    %15 = vsyncpa [#allocation4], 0
    %16 = vsyncpa [#allocation7], 0
    %17 = vsyncpa [#allocation5], 0
    // Predicated region
    $region2: #{tpu_custom_call.1} parent=1 // pred_check
      _
    $region3: #{tpu_custom_call.1} parent=1 // pred_check_branch
      %19 = sbr.rel (0) target = $region5
    $region4: #{tpu_custom_call.1} parent=1 // pred_region
      %s21 = ssub.s32 128, 128
      %22 = vsyncadd [#allocation4], %s21
      %s24 = sshll.u32 [#allocation3], 4
      %s25 = int_to_ptr.vmem [resolvable:$true] %s24
      %27 = dma.hbm_to_vmem [thread:$0]  %s0, 128, %s25, [#allocation4]
    $region5: #{tpu_custom_call.1} parent=1 // pred_fallthru
      _
    // Predicated region
    $region6: #{tpu_custom_call.1} parent=1 // pred_check
      _
    $region7: #{tpu_custom_call.1} parent=1 // pred_check_branch
      %29 = sbr.rel (0) target = $region9
    $region8: #{tpu_custom_call.1} parent=1 // pred_region
      %s31 = ssub.s32 512, 512
      %32 = vsyncadd [#allocation7], %s31
      %s33 = sshll.u32 [#allocation6], 4
      %s34 = int_to_ptr.vmem [resolvable:$true] %s33
      %39 = dma.hbm_to_vmem [thread:$0]  %s1, 512, %s34, [#allocation7], 128, 128, 8
    $region9: #{tpu_custom_call.1} parent=1 // pred_fallthru
      _
    // Predicated region
    $region10: #{tpu_custom_call.1} parent=1 // pred_check
      _
    $region11: #{tpu_custom_call.1} parent=1 // pred_check_branch
      %41 = sbr.rel (0) target = $region13
    $region12: #{tpu_custom_call.1} parent=1 // pred_region
      _
    $region13: #{tpu_custom_call.1} parent=1 // pred_fallthru
      _
    // Predicated region
    $region14: #{tpu_custom_call.1} parent=1 // pred_check
      _
    $region15: #{tpu_custom_call.1} parent=1 // pred_check_branch
      %43 = sbr.rel (0) target = $region17
    $region16: #{tpu_custom_call.1} parent=1 // pred_region
      %s45 = ssub.s32 512, 512
      %46 = vsyncadd [#allocation7], %s45
      %s47 = sshll.u32 [#allocation8], 4
      %s48 = int_to_ptr.vmem [resolvable:$true] %s47
      %53 = dma.hbm_to_vmem [thread:$0]  %s3, 512, %s48, [#allocation7], 128, 128, 8
    $region17: #{tpu_custom_call.1} parent=1 // pred_fallthru
      _
    // Predicated region
    $region18: #{tpu_custom_call.1} parent=1 // pred_check
      _
    $region19: #{tpu_custom_call.1} parent=1 // pred_check_branch
      %55 = sbr.rel (0) target = $region21
    $region20: #{tpu_custom_call.1} parent=1 // pred_region
      _
    $region21: #{tpu_custom_call.1} parent=1 // pred_fallthru
      _
    // Predicated region
    $region22: #{tpu_custom_call.1} parent=1 // pred_check
      _
    $region23: #{tpu_custom_call.1} parent=1 // pred_check_branch
      %57 = sbr.rel (0) target = $region25
    $region24: #{tpu_custom_call.1} parent=1 // pred_region
      _
    $region25: #{tpu_custom_call.1} parent=1 // pred_fallthru
      _
    // Predicated region
    $region26: #{tpu_custom_call.1} parent=1 // pred_check
      _
    $region27: #{tpu_custom_call.1} parent=1 // pred_check_branch
      %59 = sbr.rel (0) target = $region29
    $region28: #{tpu_custom_call.1} parent=1 // pred_region
      _
    $region29: #{tpu_custom_call.1} parent=1 // pred_fallthru
      _
    // Predicated region
    $region30: #{tpu_custom_call.1} parent=1 // pred_check
      _
    $region31: #{tpu_custom_call.1} parent=1 // pred_check_branch
      %61 = sbr.rel (0) target = $region33
    $region32: #{tpu_custom_call.1} parent=1 // pred_region
      %62 = dma.done [#allocation4], 128
    $region33: #{tpu_custom_call.1} parent=1 // pred_fallthru
      _
    // Predicated region
    $region34: #{tpu_custom_call.1} parent=1 // pred_check
      _
    $region35: #{tpu_custom_call.1} parent=1 // pred_check_branch
      %64 = sbr.rel (0) target = $region37
    $region36: #{tpu_custom_call.1} parent=1 // pred_region
      %65 = dma.done [#allocation7], 512
    $region37: #{tpu_custom_call.1} parent=1 // pred_fallthru
      _
    // Predicated region
    $region38: #{tpu_custom_call.1} parent=1 // pred_check
      _
    $region39: #{tpu_custom_call.1} parent=1 // pred_check_branch
      %67 = sbr.rel (0) target = $region41
    $region40: #{tpu_custom_call.1} parent=1 // pred_region
      %68 = dma.done [#allocation7], 512
    $region41: #{tpu_custom_call.1} parent=1 // pred_fallthru
      _
    %v69 = vld [vmem:[#allocation3] sm:$0xff]
    %v70 = vld [vmem:[#allocation6] sm:$0xff]
    %v71 = vld [vmem:[#allocation6 + $0x8] sm:$0xff]
    %v72 = vld [vmem:[#allocation6 + $0x10] sm:$0xff]
    %v73 = vld [vmem:[#allocation6 + $0x18] sm:$0xff]
    %v74 = vld [vmem:[%s2] sm:$0x1]
    %v76 = vlaneseq
    %v77 = vshrl.u32 %v76, 7
    %v78 = vsub.s32 0, %v77
    %v79 = vrot.slane %v74, %v78
    %vm81 = vcmask 261120
    %v83 = vsel %vm81, %v69, 0
    %85 = vmatprep.subr.mxu0 0.0
    %86 = vmatpush1.msra.mxu0 %v70
    %87 = vmatprep.subr.mxu0 0.0
    %88 = vmatpush1.msra.mxu0 %v71
    %89 = vmatprep.subr.mxu0 0.0
    %90 = vmatpush1.msra.mxu0 %v72
    %91 = vmatprep.subr.mxu0 0.0
    %92 = vmatpush1.msra.mxu0 %v73
    %93 = vmatprep.subr.mxu0 0.0
    %94 = vmatpush1.msra.mxu0 0.0
    %95 = vmatprep.subr.mxu0 0.0
    %96 = vmatpush1.msra.mxu0 0.0
    %97 = vmatprep.subr.mxu0 0.0
    %98 = vmatpush1.msra.mxu0 0.0
    %99 = vmatprep.subr.mxu0 0.0
    %100 = vmatpush1.msra.mxu0 0.0
    %101 = vmatprep.subr.mxu0 0.0
    %102 = vmatpush1.msra.mxu0 0.0
    %103 = vmatprep.subr.mxu0 0.0
    %104 = vmatpush1.msra.mxu0 0.0
    %105 = vmatprep.subr.mxu0 0.0
    %106 = vmatpush1.msra.mxu0 0.0
    %107 = vmatprep.subr.mxu0 0.0
    %108 = vmatpush1.msra.mxu0 0.0
    %109 = vmatprep.subr.mxu0 0.0
    %110 = vmatpush1.msra.mxu0 0.0
    %111 = vmatprep.subr.mxu0 0.0
    %112 = vmatpush1.msra.mxu0 0.0
    %113 = vmatprep.subr.mxu0 0.0
    %114 = vmatpush1.msra.mxu0 0.0
    %115 = vmatprep.subr.mxu0 0.0
    %116 = vmatpush1.msra.mxu0 0.0
    %117 = vmatprep.subr.mxu0 0.0
    %118 = vmatpush1.msra.mxu0 0.0
    %119 = vmatprep.subr.mxu0 0.0
    %120 = vmatpush1.msra.mxu0 0.0
    %121 = vmatprep.subr.mxu0 0.0
    %122 = vmatpush1.msra.mxu0 0.0
    %123 = vmatprep.subr.mxu0 0.0
    %124 = vmatpush1.msra.mxu0 0.0
    %125 = vmatprep.subr.mxu0 0.0
    %126 = vmatpush1.msra.mxu0 0.0
    %127 = vmatprep.subr.mxu0 0.0
    %128 = vmatpush1.msra.mxu0 0.0
    %129 = vmatprep.subr.mxu0 0.0
    %130 = vmatpush1.msra.mxu0 0.0
    %131 = vmatprep.subr.mxu0 0.0
    %132 = vmatpush1.msra.mxu0 0.0
    %133 = vmatprep.subr.mxu0 0.0
    %134 = vmatpush1.msra.mxu0 0.0
    %135 = vmatprep.subr.mxu0 0.0
    %136 = vmatpush1.msra.mxu0 0.0
    %137 = vmatprep.subr.mxu0 0.0
    %138 = vmatpush1.msra.mxu0 0.0
    %139 = vmatprep.subr.mxu0 0.0
    %140 = vmatpush1.msra.mxu0 0.0
    %141 = vmatprep.subr.mxu0 0.0
    %142 = vmatpush1.msra.mxu0 0.0
    %143 = vmatprep.subr.mxu0 0.0
    %144 = vmatpush1.msra.mxu0 0.0
    %145 = vmatprep.subr.mxu0 0.0
    %146 = vmatpush1.msra.mxu0 0.0
    %147 = vmatprep.subr.mxu0 0.0
    %148 = vmatpush1.msra.mxu0 0.0
    %149 = vmatprep.mubr.f32.mxu0 0.0
    %150 = vmatmul.mubr.f32.gmra.mrb[0].mxu0 %v83
    %v151 = vpop.f32.mrb[0].mxu0
    %v152 = vadd.f32 %v79, %v151
    %v153 = vpop.f32.mrb[0].mxu0
    %154 = vdwg.mxu0
    %v155 = vtanh.pop %v152
    %v156 = vld [vmem:[#allocation8] sm:$0xff]
    %v157 = vld [vmem:[#allocation8 + $0x8] sm:$0xff]
    %v158 = vld [vmem:[#allocation8 + $0x10] sm:$0xff]
    %v159 = vld [vmem:[#allocation8 + $0x18] sm:$0xff]
    %v160 = vld [vmem:[%s4] sm:$0x1]
    %v162 = vlaneseq
    %v163 = vshrl.u32 %v162, 7
    %v164 = vsub.s32 0, %v163
    %v165 = vrot.slane %v160, %v164
    %v168 = vsel %vm81, %v155, 0
    %170 = vmatprep.subr.mxu0 0.0
    %171 = vmatpush1.msra.mxu0 %v156
    %172 = vmatprep.subr.mxu0 0.0
    %173 = vmatpush1.msra.mxu0 %v157
    %174 = vmatprep.subr.mxu0 0.0
    %175 = vmatpush1.msra.mxu0 %v158
    %176 = vmatprep.subr.mxu0 0.0
    %177 = vmatpush1.msra.mxu0 %v159
    %178 = vmatprep.subr.mxu0 0.0
    %179 = vmatpush1.msra.mxu0 0.0
    %180 = vmatprep.subr.mxu0 0.0
    %181 = vmatpush1.msra.mxu0 0.0
    %182 = vmatprep.subr.mxu0 0.0
    %183 = vmatpush1.msra.mxu0 0.0
    %184 = vmatprep.subr.mxu0 0.0
    %185 = vmatpush1.msra.mxu0 0.0
    %186 = vmatprep.subr.mxu0 0.0
    %187 = vmatpush1.msra.mxu0 0.0
    %188 = vmatprep.subr.mxu0 0.0
    %189 = vmatpush1.msra.mxu0 0.0
    %190 = vmatprep.subr.mxu0 0.0
    %191 = vmatpush1.msra.mxu0 0.0
    %192 = vmatprep.subr.mxu0 0.0
    %193 = vmatpush1.msra.mxu0 0.0
    %194 = vmatprep.subr.mxu0 0.0
    %195 = vmatpush1.msra.mxu0 0.0
    %196 = vmatprep.subr.mxu0 0.0
    %197 = vmatpush1.msra.mxu0 0.0
    %198 = vmatprep.subr.mxu0 0.0
    %199 = vmatpush1.msra.mxu0 0.0
    %200 = vmatprep.subr.mxu0 0.0
    %201 = vmatpush1.msra.mxu0 0.0
    %202 = vmatprep.subr.mxu0 0.0
    %203 = vmatpush1.msra.mxu0 0.0
    %204 = vmatprep.subr.mxu0 0.0
    %205 = vmatpush1.msra.mxu0 0.0
    %206 = vmatprep.subr.mxu0 0.0
    %207 = vmatpush1.msra.mxu0 0.0
    %208 = vmatprep.subr.mxu0 0.0
    %209 = vmatpush1.msra.mxu0 0.0
    %210 = vmatprep.subr.mxu0 0.0
    %211 = vmatpush1.msra.mxu0 0.0
    %212 = vmatprep.subr.mxu0 0.0
    %213 = vmatpush1.msra.mxu0 0.0
    %214 = vmatprep.subr.mxu0 0.0
    %215 = vmatpush1.msra.mxu0 0.0
    %216 = vmatprep.subr.mxu0 0.0
    %217 = vmatpush1.msra.mxu0 0.0
    %218 = vmatprep.subr.mxu0 0.0
    %219 = vmatpush1.msra.mxu0 0.0
    %220 = vmatprep.subr.mxu0 0.0
    %221 = vmatpush1.msra.mxu0 0.0
    %222 = vmatprep.subr.mxu0 0.0
    %223 = vmatpush1.msra.mxu0 0.0
    %224 = vmatprep.subr.mxu0 0.0
    %225 = vmatpush1.msra.mxu0 0.0
    %226 = vmatprep.subr.mxu0 0.0
    %227 = vmatpush1.msra.mxu0 0.0
    %228 = vmatprep.subr.mxu0 0.0
    %229 = vmatpush1.msra.mxu0 0.0
    %230 = vmatprep.subr.mxu0 0.0
    %231 = vmatpush1.msra.mxu0 0.0
    %232 = vmatprep.subr.mxu0 0.0
    %233 = vmatpush1.msra.mxu0 0.0
    %234 = vmatprep.mubr.f32.mxu0 0.0
    %235 = vmatmul.mubr.f32.gmra.mrb[0].mxu0 %v168
    %v236 = vpop.f32.mrb[0].mxu0
    %v237 = vadd.f32 %v165, %v236
    %v238 = vpop.f32.mrb[0].mxu0
    %239 = vdwg.mxu0
    %v240 = vtanh.pop %v237
    %v241 = vld [vmem:[%s5] sm:$0x1]
    %v243 = vlaneseq
    %v244 = vshrl.u32 %v243, 7
    %v245 = vsub.s32 0, %v244
    %v246 = vrot.slane %v241, %v245
    %v248 = vmul.f32 %v240, %v246
    %v249 = vsel %vm81, %v248, 0.0
    %250 = vadd.xlane.f32.xlu0 %v249
    %v251 = vpop.xlane.xlu0 %250
    %s252 = sld [smem:[#allocation2]]
    %v253 = vstv %s252
    %v254 = vadd.f32 %v251, %v253
    %255 = vst.msk [vmem:[#allocation9] sm:$0xff] %vm81, %v155
    %vm256 = vcmask 7168
    %257 = vst.msk [vmem:[%s7] sm:$0xff] %vm256, %v254
    // Predicated region
    $region42: #{tpu_custom_call.1} parent=1 // pred_check
      _
    $region43: #{tpu_custom_call.1} parent=1 // pred_check_branch
      %259 = sbr.rel (0) target = $region45
    $region44: #{tpu_custom_call.1} parent=1 // pred_region
      _
    $region45: #{tpu_custom_call.1} parent=1 // pred_fallthru
      _
    // Predicated region
    $region46: #{tpu_custom_call.1} parent=1 // pred_check
      _
    $region47: #{tpu_custom_call.1} parent=1 // pred_check_branch
      %261 = sbr.rel (0) target = $region49
    $region48: #{tpu_custom_call.1} parent=1 // pred_region
      %s263 = ssub.s32 128, 128
      %264 = vsyncadd [#allocation5], %s263
      %s266 = sshll.u32 [#allocation9], 4
      %s267 = int_to_ptr.vmem [resolvable:$true] %s266
      %269 = dma.vmem_to_hbm [thread:$0]  %s267, 128, %s8, [#allocation5]
    $region49: #{tpu_custom_call.1} parent=1 // pred_fallthru
      _
    // Predicated region
    $region50: #{tpu_custom_call.1} parent=1 // pred_check
      _
    $region51: #{tpu_custom_call.1} parent=1 // pred_check_branch
      %271 = sbr.rel (0) target = $region53
    $region52: #{tpu_custom_call.1} parent=1 // pred_region
      _
    $region53: #{tpu_custom_call.1} parent=1 // pred_fallthru
      _
    // Predicated region
    $region54: #{tpu_custom_call.1} parent=1 // pred_check
      _
    $region55: #{tpu_custom_call.1} parent=1 // pred_check_branch
      %273 = sbr.rel (0) target = $region57
    $region56: #{tpu_custom_call.1} parent=1 // pred_region
      %274 = dma.done [#allocation5], 128
    $region57: #{tpu_custom_call.1} parent=1 // pred_fallthru
      _
    %275 = vsyncpa [#allocation4], 1
    %276 = vsyncpa [#allocation7], 1
    %277 = vsyncpa [#allocation5], 1

</llo_original>
